<compile_context>
chip_gen: v7x
topology: tpu7x:2x2x1
jax: 0.10.0
libtpu: 0.0.40
codegen_flags: <defaults>
</compile_context>

<pallas_src>
import numpy as np
import jax
import jax.numpy as jnp
from jax import lax
from jax.experimental import pallas as pl
from jax.experimental.pallas import tpu as pltpu

_BN_EPS = 1e-5


def _round_up(a, b):
    return (a + b - 1) // b * b


def _cdiv(a, b):
    return -(-a // b)


def _vmem_limit_bytes():
    """Generation-aware VMEM limit (~0.75 of per-core capacity, capped)."""
    cap = None
    try:
        cap = int(getattr(pltpu.get_tpu_info(), "vmem_capacity_bytes"))
    except Exception:
        cap = None
    if not cap or cap <= 0:
        try:
            kind = jax.devices()[0].device_kind.lower()
        except Exception:
            kind = ""
        big = ("v4" in kind) or ("v5" in kind) or ("v6" in kind)
        cap = (128 if big else 64) * 1024 * 1024
    return max(32 * 1024 * 1024, min(cap * 3 // 4, 100 * 1024 * 1024))


# ---------------------------------------------------------------------------
# Host-side construction of the pooling / upsampling matrices
# (exact PyTorch AdaptiveAvgPool2d / bilinear align_corners=True semantics).
# ---------------------------------------------------------------------------
def _adaptive_pool_indicator(out_size, in_size):
    """0/1 membership matrix + per-cell window sizes (exact PyTorch windows)."""
    M = np.zeros((out_size, in_size), np.float32)
    cnt = np.zeros((out_size,), np.float32)
    for i in range(out_size):
        start = (i * in_size) // out_size
        end = -((-(i + 1) * in_size) // out_size)     # ceil((i+1)*in/out)
        M[i, start:end] = 1.0
        cnt[i] = end - start
    return M, cnt


def _bilinear_upsample_matrix(out_size, in_size):
    U = np.zeros((out_size, in_size), np.float32)
    if in_size == 1:
        U[:, 0] = 1.0
        return U
    scale = 0.0 if out_size == 1 else (in_size - 1) / (out_size - 1)
    for o in range(out_size):
        pos = o * scale
        i0 = min(int(np.floor(pos)), in_size - 1)
        i1 = min(i0 + 1, in_size - 1)
        frac = pos - i0
        U[o, i0] += 1.0 - frac
        U[o, i1] += frac
    return U


# ---------------------------------------------------------------------------
# VMEM-budget-aware tile selection.
# ---------------------------------------------------------------------------
def _choose_pass1_tiling(hw, nc, ssq_pad, vmem_limit):
    budget = int(vmem_limit * 0.7)
    fixed = 2 * nc * ssq_pad * 4                 # resident pooled output block (x2 buffers)
    per_col = 2 * nc * 4 + 2 * ssq_pad * 2       # x (f32) + Pt (bf16) blocks, double-buffered
    thw_max = (budget - fixed) // per_col if budget > fixed else 128
    thw_max = max(128, min(thw_max, _round_up(hw, 128)))
    thw_max = thw_max // 128 * 128
    # Prefer a 2-way split (v7x megacore) with an even tile count and every
    # tile start strictly inside hw (no fully-OOB DMAs).
    t = thw_max
    while t >= 128:
        nt = _cdiv(hw, t)
        if nt >= 2 and nt % 2 == 0:
            return 2, nt // 2, t
        t -= 128
    return 1, _cdiv(hw, thw_max), thw_max


def _choose_pass2_tiling(hw, n_batch, lcr_pad, ssq_pad, vmem_limit):
    budget = int(vmem_limit * 0.7)
    fixed = 2 * n_batch * lcr_pad * ssq_pad * 2             # resident yn (bf16)
    per_col = 2 * n_batch * lcr_pad * 2 + 2 * ssq_pad * 2   # out (bf16) + Ut (bf16) blocks
    thw = (budget - fixed) // per_col if budget > fixed else 128
    thw = max(128, min(thw, _round_up(hw, 128)))
    thw = thw // 128 * 128
    return _cdiv(hw, thw), thw


# ---------------------------------------------------------------------------
# Pass 1: fused adaptive-avg-pool partial sums (all levels), x read once, f32
#         directly from HBM, bf16 cast + tail mask in-kernel.
# ---------------------------------------------------------------------------
def _pool_partial_sums(x2, pt, *, nc, hw, ssq_pad, n_split, tps, thw, vmem_limit):
    def kernel(x_ref, pt_ref, out_ref):
        s = pl.program_id(0)
        j = pl.program_id(1)

        @pl.when(j == 0)
        def _init():
            out_ref[...] = jnp.zeros_like(out_ref)

        # Zero out columns past hw (partial last tile), then cast to bf16 for
        # the MXU.  Both ops are hidden under the HBM DMA.
        col0 = (s * tps + j) * thw
        lane = lax.broadcasted_iota(jnp.int32, (1, thw), 1)
        valid = (col0 + lane) < hw
        xv = jnp.where(valid, x_ref[...], 0.0).astype(jnp.bfloat16)
        out_ref[0] += jnp.dot(xv, pt_ref[...], preferred_element_type=jnp.float32)

    hw_pad = n_split * tps * thw
    flops = 2 * nc * hw_pad * ssq_pad
    bytes_accessed = nc * hw * 4 + hw_pad * ssq_pad * 2 + n_split * nc * ssq_pad * 4
    return pl.pallas_call(
        kernel,
        out_shape=jax.ShapeDtypeStruct((n_split, nc, ssq_pad), jnp.float32),
        grid_spec=pltpu.PrefetchScalarGridSpec(
            num_scalar_prefetch=0,
            grid=(n_split, tps),
            in_specs=[
                pl.BlockSpec((nc, thw), lambda s, j: (0, s * tps + j)),       # x (f32)
                pl.BlockSpec((thw, ssq_pad), lambda s, j: (s * tps + j, 0)),  # Pt (bf16 0/1)
            ],
            out_specs=pl.BlockSpec((1, nc, ssq_pad), lambda s, j: (s, 0, 0)),
        ),
        compiler_params=pltpu.CompilerParams(
            dimension_semantics=("parallel", "arbitrary"),
            vmem_limit_bytes=vmem_limit),
        cost_estimate=pl.CostEstimate(flops=int(flops), transcendentals=0,
                                      bytes_accessed=int(bytes_accessed)),
    )(x2, pt)


# ---------------------------------------------------------------------------
# Pass 2: combine partial sums + 1/area scale + stacked 1x1 conv + train-mode
#         BatchNorm + ReLU (tiny, runs once; constants only touched here).
# ---------------------------------------------------------------------------
def _conv_bn_relu(pooled, w, inv_area, gamma, beta, icnt, cstart, cend, *,
                  n_batch, cin, lcr_pad, ssq_pad, n_split, vmem_limit):
    def kernel(p_ref, w_ref, ia_ref, g_ref, b_ref, ic_ref, cs_ref, ce_ref,
               yn_ref, y_scr):
        # Combine the per-split partial sums and apply the exact (f32)
        # adaptive-pool 1/area weights.
        pooled_f = jnp.sum(p_ref[...], axis=0) * ia_ref[...]      # (N*C, S) f32
        wv = w_ref[...]                                           # (LCr, C) bf16
        # Per-image stacked 1x1 conv.  (A single batched matmul would fill a
        # 256-wide MXU slightly better, but this runs once and is microseconds.)
        for bi in range(n_batch):
            pb = pooled_f[bi * cin:(bi + 1) * cin, :].astype(jnp.bfloat16)
            y_scr[bi] = jnp.dot(wv, pb, preferred_element_type=jnp.float32)

        y = y_scr[...]                                            # (N, LCr, S) f32
        # In-kernel column-validity mask (level li owns columns [cs, ce)).
        col = lax.broadcasted_iota(jnp.int32, (lcr_pad, ssq_pad), 1)
        mask = ((col >= cs_ref[...]) & (col < ce_ref[...])).astype(jnp.float32)

        # Train-mode BatchNorm: masked, biased variance, eps=1e-5, all in f32.
        ym = y * mask
        mean = jnp.sum(jnp.sum(ym, axis=2, keepdims=True),
                       axis=0, keepdims=True) * ic_ref[...]
        d = (y - mean) * mask
        var = jnp.sum(jnp.sum(d * d, axis=2, keepdims=True),
                      axis=0, keepdims=True) * ic_ref[...]
        inv = g_ref[...] * lax.rsqrt(var + _BN_EPS)
        yn = jnp.maximum((y - mean) * inv + b_ref[...], 0.0) * mask
        yn_ref[...] = yn.astype(jnp.bfloat16)

    nc = n_batch * cin
    return pl.pallas_call(
        kernel,
        out_shape=jax.ShapeDtypeStruct((n_batch, lcr_pad, ssq_pad), jnp.bfloat16),
        grid_spec=pltpu.PrefetchScalarGridSpec(
            num_scalar_prefetch=0,
            grid=(1,),
            in_specs=[
                pl.BlockSpec((n_split, nc, ssq_pad), lambda i: (0, 0, 0)),  # pooled partials
                pl.BlockSpec((lcr_pad, cin), lambda i: (0, 0)),             # stacked W
                pl.BlockSpec((1, ssq_pad), lambda i: (0, 0)),               # 1/area per column
                pl.BlockSpec((lcr_pad, 1), lambda i: (0, 0)),               # gamma
                pl.BlockSpec((lcr_pad, 1), lambda i: (0, 0)),               # beta
                pl.BlockSpec((lcr_pad, 1), lambda i: (0, 0)),               # 1/(N*s*s)
                pl.BlockSpec((lcr_pad, 1), lambda i: (0, 0)),               # col start
                pl.BlockSpec((lcr_pad, 1), lambda i: (0, 0)),               # col end
            ],
            out_specs=pl.BlockSpec((n_batch, lcr_pad, ssq_pad), lambda i: (0, 0, 0)),
            scratch_shapes=[pltpu.VMEM((n_batch, lcr_pad, ssq_pad), jnp.float32)]),
        compiler_params=pltpu.CompilerParams(
            dimension_semantics=("arbitrary",),
            vmem_limit_bytes=vmem_limit),
    )(pooled, w, inv_area, gamma, beta, icnt, cstart, cend)


# ---------------------------------------------------------------------------
# Pass 3: bilinear upsample (align_corners=True) of all levels with a single
#         combined matrix; bf16 output (write-bound pass), parallel HW tiles.
# ---------------------------------------------------------------------------
def _upsample(yn, ut, *, n_batch, lcr_pad, ssq_pad, nt_out, thw_out, vmem_limit):
    def kernel(yn_ref, ut_ref, o_ref):
        yn2 = yn_ref[...].reshape(n_batch * lcr_pad, ssq_pad)     # free (major merge)
        up = jnp.dot(yn2, ut_ref[...], preferred_element_type=jnp.float32)
        o_ref[...] = up.reshape(n_batch, lcr_pad, thw_out).astype(o_ref.dtype)

    hw_pad = nt_out * thw_out
    flops = 2 * n_batch * lcr_pad * ssq_pad * hw_pad
    bytes_accessed = yn.size * 2 + ut.size * 2 + n_batch * lcr_pad * hw_pad * 2
    return pl.pallas_call(
        kernel,
        out_shape=jax.ShapeDtypeStruct((n_batch, lcr_pad, hw_pad), jnp.bfloat16),
        grid_spec=pltpu.PrefetchScalarGridSpec(
            num_scalar_prefetch=0,
            grid=(nt_out,),
            in_specs=[
                pl.BlockSpec((n_batch, lcr_pad, ssq_pad), lambda j: (0, 0, 0)),
                pl.BlockSpec((ssq_pad, thw_out), lambda j: (0, j)),
            ],
            out_specs=pl.BlockSpec((n_batch, lcr_pad, thw_out), lambda j: (0, 0, j))),
        compiler_params=pltpu.CompilerParams(
            dimension_semantics=("parallel",),
            vmem_limit_bytes=vmem_limit),
        cost_estimate=pl.CostEstimate(flops=int(flops), transcendentals=0,
                                      bytes_accessed=int(bytes_accessed)),
    )(yn, ut)


# ---------------------------------------------------------------------------
# Module wrapper: deterministic synthetic parameters, cached geometry, final
# channel concat with the input (PyTorch cat dim=1).
# ---------------------------------------------------------------------------
class PyramidPoolingModulePallas:
    def __init__(self, in_dim, reduction_dim, setting, key):
        self.in_dim = int(in_dim)
        self.reduction_dim = int(reduction_dim)
        self.setting = tuple(int(s) for s in setting)
        self.n_levels = len(self.setting)
        self.lcr = self.n_levels * self.reduction_dim          # packed output channels
        self.lcr_pad = _round_up(self.lcr, 8)
        self.ssq_total = sum(s * s for s in self.setting)
        self.ssq_pad = _round_up(self.ssq_total, 128)
        offs, off = [], 0
        for s in self.setting:
            offs.append(off)
            off += s * s
        self.ssq_offsets = tuple(offs)
        self.vmem_limit = _vmem_limit_bytes()

        # Synthetic parameters: per-level 1x1 conv weight (no bias) + BN affine,
        # packed level-major with stride reduction_dim (no per-level channel pad).
        w_stack = np.zeros((self.lcr_pad, self.in_dim), np.float32)
        gamma = np.ones((self.lcr_pad, 1), np.float32)
        beta = np.zeros((self.lcr_pad, 1), np.float32)
        cstart = np.zeros((self.lcr_pad, 1), np.int32)
        cend = np.zeros((self.lcr_pad, 1), np.int32)
        for li, s in enumerate(self.setting):
            k = jax.random.fold_in(key, li)
            kw, kg, kb = jax.random.split(k, 3)
            wli = 0.1 * jax.random.normal(kw, (self.reduction_dim, self.in_dim), jnp.float32)
            g = 1.0 + 0.1 * jax.random.normal(kg, (self.reduction_dim,), jnp.float32)
            b = 0.1 * jax.random.normal(kb, (self.reduction_dim,), jnp.float32)
            r0 = li * self.reduction_dim
            w_stack[r0:r0 + self.reduction_dim, :] = np.asarray(wli)
            gamma[r0:r0 + self.reduction_dim, 0] = np.asarray(g)
            beta[r0:r0 + self.reduction_dim, 0] = np.asarray(b)
            cstart[r0:r0 + self.reduction_dim, 0] = self.ssq_offsets[li]
            cend[r0:r0 + self.reduction_dim, 0] = self.ssq_offsets[li] + s * s
        self.w_stack = jnp.asarray(w_stack, jnp.bfloat16)
        self.gamma = jnp.asarray(gamma, jnp.float32)
        self.beta = jnp.asarray(beta, jnp.float32)
        self.col_start = jnp.asarray(cstart, jnp.int32)
        self.col_end = jnp.asarray(cend, jnp.int32)

        self._geom_cache = {}   # (N, H, W) -> precomputed device constants / tiling

    def _geometry(self, n, h, w):
        key = (n, h, w)
        geom = self._geom_cache.get(key)
        if geom is not None:
            return geom
        hw = h * w
        nc = n * self.in_dim
        n_split, tps, thw_in = _choose_pass1_tiling(hw, nc, self.ssq_pad, self.vmem_limit)
        hw_pad_in = n_split * tps * thw_in
        nt_out, thw_out = _choose_pass2_tiling(hw, n, self.lcr_pad, self.ssq_pad,
                                               self.vmem_limit)
        hw_pad_out = nt_out * thw_out

        # Fused 0/1 pooling-membership matrix (all levels), exact 1/area per
        # pooled cell, and the combined bilinear-upsample matrix.
        pt = np.zeros((hw_pad_in, self.ssq_pad), np.float32)
        inv_area = np.zeros((1, self.ssq_pad), np.float32)
        ut = np.zeros((self.ssq_pad, hw_pad_out), np.float32)
        for li, s in enumerate(self.setting):
            mh, ch = _adaptive_pool_indicator(s, h)
            mw, cw = _adaptive_pool_indicator(s, w)
            c0 = self.ssq_offsets[li]
            pt[:hw, c0:c0 + s * s] = np.kron(mh, mw).T
            inv_area[0, c0:c0 + s * s] = 1.0 / np.outer(ch, cw).reshape(-1)
            uh = _bilinear_upsample_matrix(h, s)
            uw = _bilinear_upsample_matrix(w, s)
            ut[c0:c0 + s * s, :hw] = np.kron(uh, uw).T

        # BatchNorm normalization count per output-channel row: N * s * s.
        icnt = np.ones((self.lcr_pad, 1), np.float32)
        for li, s in enumerate(self.setting):
            r0 = li * self.reduction_dim
            icnt[r0:r0 + self.reduction_dim, 0] = 1.0 / float(n * s * s)

        geom = dict(pt=jnp.asarray(pt, jnp.bfloat16),        # exact 0/1 in bf16
                    ut=jnp.asarray(ut, jnp.bfloat16),
                    inv_area=jnp.asarray(inv_area, jnp.float32),
                    icnt=jnp.asarray(icnt, jnp.float32),
                    n_split=n_split, tps=tps, thw_in=thw_in, hw_pad_in=hw_pad_in,
                    nt_out=nt_out, thw_out=thw_out, hw_pad_out=hw_pad_out)
        self._geom_cache[key] = geom
        return geom

    def __call__(self, x):
        n, c, h, w = x.shape
        assert c == self.in_dim
        hw = h * w
        g = self._geometry(n, h, w)

        # Free reshape -- x stays f32 in HBM; no cast/pad pre-pass.
        x2 = x.reshape(n * c, hw)

        pooled = _pool_partial_sums(
            x2, g["pt"], nc=n * c, hw=hw, ssq_pad=self.ssq_pad,
            n_split=g["n_split"], tps=g["tps"], thw=g["thw_in"],
            vmem_limit=self.vmem_limit)

        yn = _conv_bn_relu(
            pooled, self.w_stack, g["inv_area"], self.gamma, self.beta,
            g["icnt"], self.col_start, self.col_end,
            n_batch=n, cin=c, lcr_pad=self.lcr_pad, ssq_pad=self.ssq_pad,
            n_split=g["n_split"], vmem_limit=self.vmem_limit)

        up = _upsample(
            yn, g["ut"], n_batch=n, lcr_pad=self.lcr_pad, ssq_pad=self.ssq_pad,
            nt_out=g["nt_out"], thw_out=g["thw_out"], vmem_limit=self.vmem_limit)

        # Strip padding, cast back to f32 and concat with x (PyTorch cat dim=1);
        # under jit the slice/cast/reshape fuse into the concat copy.
        up = up[:, :self.lcr, :hw].astype(jnp.float32).reshape(n, self.lcr, h, w)
        return jnp.concatenate([x, up], axis=1)


if __name__ == "__main__":
    key = jax.random.PRNGKey(0)
    kx, kp = jax.random.split(key)

    N, C, H, W = 2, 4, 16, 16
    reduction_dim = 4
    setting = (1, 2, 3, 6)

    x = jax.random.normal(kx, (N, C, H, W), jnp.float32)
    ppm = PyramidPoolingModulePallas(in_dim=C, reduction_dim=reduction_dim,
                                     setting=setting, key=kp)
    fwd = jax.jit(ppm.__call__)
    out = jax.block_until_ready(fwd(x))

    assert out.shape == (N, C + reduction_dim * len(setting), H, W), out.shape
    assert bool(jnp.all(jnp.isfinite(out)))
    # First C channels are the untouched input (PyTorch cat([x, ...], dim=1)).
    assert bool(jnp.allclose(out[:, :C], x))
    print("KERNEL_OK")
</pallas_src>

<mosaic_0001>
module attributes {stable_mosaic.version = 11 : i64} {
  func.func @kernel(%arg0: i32, %arg1: i32, %arg2: memref<8x128xf32, #tpu.memory_space<vmem>>, %arg3: memref<128x128xbf16, #tpu.memory_space<vmem>>, %arg4: memref<1x8x128xf32, #tpu.memory_space<vmem>>) attributes {dimension_semantics = [#tpu.dimension_semantics<parallel>, #tpu.dimension_semantics<arbitrary>], iteration_bounds = array<i64: 2, 1>, scalar_prefetch = 0 : i64, scratch_operands = 0 : i64, tpu.core_type = #tpu.core_type<tc>, window_params = [{transform_indices = @transform_0, window_bounds = array<i64: 8, 128>}, {transform_indices = @transform_1, window_bounds = array<i64: 128, 128>}, {transform_indices = @transform_2, window_bounds = array<i64: 1, 8, 128>}]} {
    %c0_i32 = arith.constant 0 : i32
    %0 = arith.cmpi eq, %arg1, %c0_i32 : i32
    %1 = arith.extui %0 : i1 to i32
    %c0_i32_0 = arith.constant 0 : i32
    %2 = arith.cmpi ne, %1, %c0_i32_0 : i32
    scf.if %2 {
      %cst_11 = arith.constant 0.000000e+00 : f32
      %25 = vector.broadcast %cst_11 : f32 to vector<1x8x128xf32>
      %c0_12 = arith.constant 0 : index
      %c0_13 = arith.constant 0 : index
      %c0_14 = arith.constant 0 : index
      %26 = vector.load %arg4[%c0_12, %c0_13, %c0_14] : memref<1x8x128xf32, #tpu.memory_space<vmem>>, vector<1x8x128xf32>
      tpu.vector_store %arg4[%c0_12, %c0_13, %c0_14], %25 {strides = array<i32>} : memref<1x8x128xf32, #tpu.memory_space<vmem>>, vector<1x8x128xf32>,
    } else {
    }
    %c1_i32 = arith.constant 1 : i32
    %3 = arith.muli %arg0, %c1_i32 : i32
    %4 = arith.addi %3, %arg1 : i32
    %c128_i32 = arith.constant 128 : i32
    %5 = arith.muli %4, %c128_i32 : i32
    %6 = tpu.iota {dimensions = array<i32: 1>} : vector<1x128xi32>
    %7 = vector.broadcast %5 : i32 to vector<1x128xi32>
    %8 = arith.addi %7, %6 : vector<1x128xi32>
    %c256_i32 = arith.constant 256 : i32
    %9 = vector.broadcast %c256_i32 : i32 to vector<1x128xi32>
    %10 = arith.cmpi slt, %8, %9 : vector<1x128xi32>
    %c0 = arith.constant 0 : index
    %c0_1 = arith.constant 0 : index
    %11 = vector.load %arg2[%c0, %c0_1] : memref<8x128xf32, #tpu.memory_space<vmem>>, vector<8x128xf32>
    %cst = arith.constant 0.000000e+00 : f32
    %12 = vector.shape_cast %10 : vector<1x128xi1> to vector<1x128xi1>
    %13 = vector.broadcast %12 : vector<1x128xi1> to vector<8x128xi1>
    %14 = vector.broadcast %cst : f32 to vector<8x128xf32>
    %15 = arith.select %13, %11, %14 : vector<8x128xi1>, vector<8x128xf32>
    %16 = arith.truncf %15 : vector<8x128xf32> to vector<8x128xbf16>
    %c0_2 = arith.constant 0 : index
    %c0_3 = arith.constant 0 : index
    %c0_4 = arith.constant 0 : index
    %17 = vector.load %arg4[%c0_2, %c0_3, %c0_4] : memref<1x8x128xf32, #tpu.memory_space<vmem>>, vector<1x8x128xf32>
    %18 = vector.shape_cast %17 : vector<1x8x128xf32> to vector<8x128xf32>
    %c0_5 = arith.constant 0 : index
    %c0_6 = arith.constant 0 : index
    %19 = vector.load %arg3[%c0_5, %c0_6] : memref<128x128xbf16, #tpu.memory_space<vmem>>, vector<128x128xbf16>
    %cst_7 = arith.constant dense<0.000000e+00> : vector<8x128xf32>
    %20 = tpu.matmul %16, %19, %cst_7 {dimension_numbers = #tpu.dot_dimension_numbers<[1], [0], [0], [1], [0, 0, 1, 1], [], []>} : vector<8x128xbf16>, vector<128x128xbf16>, vector<8x128xf32> -> vector<8x128xf32>
    %21 = arith.addf %18, %20 : vector<8x128xf32>
    %c0_8 = arith.constant 0 : index
    %c0_9 = arith.constant 0 : index
    %c0_10 = arith.constant 0 : index
    %22 = vector.load %arg4[%c0_8, %c0_9, %c0_10] : memref<1x8x128xf32, #tpu.memory_space<vmem>>, vector<1x8x128xf32>
    %23 = vector.shape_cast %22 : vector<1x8x128xf32> to vector<8x128xf32>
    %24 = vector.shape_cast %21 : vector<8x128xf32> to vector<1x8x128xf32>
    tpu.vector_store %arg4[%c0_8, %c0_9, %c0_10], %24 {strides = array<i32>} : memref<1x8x128xf32, #tpu.memory_space<vmem>>, vector<1x8x128xf32>,
    return
  }
  func.func @transform_0(%arg0: i32, %arg1: i32) -> (i32, i32) {
    %c1_i32 = arith.constant 1 : i32
    %0 = arith.muli %arg0, %c1_i32 : i32
    %1 = arith.addi %0, %arg1 : i32
    %c0_i32 = arith.constant 0 : i32
    %c0_i32_0 = arith.constant 0 : i32
    return %c0_i32, %1 : i32, i32
  }
  func.func @transform_1(%arg0: i32, %arg1: i32) -> (i32, i32) {
    %c1_i32 = arith.constant 1 : i32
    %0 = arith.muli %arg0, %c1_i32 : i32
    %1 = arith.addi %0, %arg1 : i32
    %c0_i32 = arith.constant 0 : i32
    %c0_i32_0 = arith.constant 0 : i32
    return %1, %c0_i32 : i32, i32
  }
  func.func @transform_2(%arg0: i32, %arg1: i32) -> (i32, i32, i32) {
    %c0_i32 = arith.constant 0 : i32
    %c0_i32_0 = arith.constant 0 : i32
    %c0_i32_1 = arith.constant 0 : i32
    return %arg0, %c0_i32, %c0_i32_0 : i32, i32, i32
  }
}

module attributes {stable_mosaic.version = 11 : i64} {
  func.func @kernel(%arg0: i32, %arg1: memref<2x8x128xf32, #tpu.memory_space<vmem>>, %arg2: memref<16x4xbf16, #tpu.memory_space<vmem>>, %arg3: memref<1x128xf32, #tpu.memory_space<vmem>>, %arg4: memref<16x1xf32, #tpu.memory_space<vmem>>, %arg5: memref<16x1xf32, #tpu.memory_space<vmem>>, %arg6: memref<16x1xf32, #tpu.memory_space<vmem>>, %arg7: memref<16x1xi32, #tpu.memory_space<vmem>>, %arg8: memref<16x1xi32, #tpu.memory_space<vmem>>, %arg9: memref<2x16x128xbf16, #tpu.memory_space<vmem>>, %arg10: memref<2x16x128xf32, #tpu.memory_space<vmem>>) attributes {dimension_semantics = [#tpu.dimension_semantics<arbitrary>], iteration_bounds = array<i64: 1>, scalar_prefetch = 0 : i64, scratch_operands = 1 : i64, tpu.core_type = #tpu.core_type<tc>, window_params = [{pipeline_mode = #tpu.pipeline_mode<synchronous>, transform_indices = @transform_0, window_bounds = array<i64: 2, 8, 128>}, {pipeline_mode = #tpu.pipeline_mode<synchronous>, transform_indices = @transform_1, window_bounds = array<i64: 16, 4>}, {pipeline_mode = #tpu.pipeline_mode<synchronous>, transform_indices = @transform_2, window_bounds = array<i64: 1, 128>}, {pipeline_mode = #tpu.pipeline_mode<synchronous>, transform_indices = @transform_3, window_bounds = array<i64: 16, 1>}, {pipeline_mode = #tpu.pipeline_mode<synchronous>, transform_indices = @transform_4, window_bounds = array<i64: 16, 1>}, {pipeline_mode = #tpu.pipeline_mode<synchronous>, transform_indices = @transform_5, window_bounds = array<i64: 16, 1>}, {pipeline_mode = #tpu.pipeline_mode<synchronous>, transform_indices = @transform_6, window_bounds = array<i64: 16, 1>}, {pipeline_mode = #tpu.pipeline_mode<synchronous>, transform_indices = @transform_7, window_bounds = array<i64: 16, 1>}, {pipeline_mode = #tpu.pipeline_mode<synchronous>, transform_indices = @transform_8, window_bounds = array<i64: 2, 16, 128>}]} {
    %c0 = arith.constant 0 : index
    %c0_0 = arith.constant 0 : index
    %c0_1 = arith.constant 0 : index
    %0 = vector.load %arg1[%c0, %c0_0, %c0_1] : memref<2x8x128xf32, #tpu.memory_space<vmem>>, vector<2x8x128xf32>
    %cst = arith.constant dense<0.000000e+00> : vector<8x128xf32>
    %1 = vector.multi_reduction <add>, %0, %cst [0] : vector<2x8x128xf32> to vector<8x128xf32>
    %c0_2 = arith.constant 0 : index
    %c0_3 = arith.constant 0 : index
    %2 = vector.load %arg3[%c0_2, %c0_3] : memref<1x128xf32, #tpu.memory_space<vmem>>, vector<1x128xf32>
    %3 = vector.broadcast %2 : vector<1x128xf32> to vector<8x128xf32>
    %4 = arith.mulf %1, %3 : vector<8x128xf32>
    %c0_4 = arith.constant 0 : index
    %c0_5 = arith.constant 0 : index
    %5 = vector.load %arg2[%c0_4, %c0_5] : memref<16x4xbf16, #tpu.memory_space<vmem>>, vector<16x4xbf16>
    %6 = vector.extract_strided_slice %4 {offsets = [0, 0], sizes = [4, 128], strides = [1, 1]} : vector<8x128xf32> to vector<4x128xf32>
    %7 = arith.truncf %6 : vector<4x128xf32> to vector<4x128xbf16>
    %cst_6 = arith.constant dense<0.000000e+00> : vector<16x128xf32>
    %8 = tpu.matmul %5, %7, %cst_6 {dimension_numbers = #tpu.dot_dimension_numbers<[1], [0], [0], [1], [0, 0, 1, 1], [], []>} : vector<16x4xbf16>, vector<4x128xbf16>, vector<16x128xf32> -> vector<16x128xf32>
    %c0_7 = arith.constant 0 : index
    %c0_8 = arith.constant 0 : index
    %c0_9 = arith.constant 0 : index
    %9 = vector.load %arg10[%c0_7, %c0_8, %c0_9] : memref<2x16x128xf32, #tpu.memory_space<vmem>>, vector<1x16x128xf32>
    %10 = vector.shape_cast %9 : vector<1x16x128xf32> to vector<16x128xf32>
    %11 = vector.shape_cast %8 : vector<16x128xf32> to vector<1x16x128xf32>
    tpu.vector_store %arg10[%c0_7, %c0_8, %c0_9], %11 {strides = array<i32>} : memref<2x16x128xf32, #tpu.memory_space<vmem>>, vector<1x16x128xf32>,
    %12 = vector.extract_strided_slice %4 {offsets = [4, 0], sizes = [4, 128], strides = [1, 1]} : vector<8x128xf32> to vector<4x128xf32>
    %13 = arith.truncf %12 : vector<4x128xf32> to vector<4x128xbf16>
    %cst_10 = arith.constant dense<0.000000e+00> : vector<16x128xf32>
    %14 = tpu.matmul %5, %13, %cst_10 {dimension_numbers = #tpu.dot_dimension_numbers<[1], [0], [0], [1], [0, 0, 1, 1], [], []>} : vector<16x4xbf16>, vector<4x128xbf16>, vector<16x128xf32> -> vector<16x128xf32>
    %c1 = arith.constant 1 : index
    %c0_11 = arith.constant 0 : index
    %c0_12 = arith.constant 0 : index
    %15 = vector.load %arg10[%c1, %c0_11, %c0_12] : memref<2x16x128xf32, #tpu.memory_space<vmem>>, vector<1x16x128xf32>
    %16 = vector.shape_cast %15 : vector<1x16x128xf32> to vector<16x128xf32>
    %17 = vector.shape_cast %14 : vector<16x128xf32> to vector<1x16x128xf32>
    tpu.vector_store %arg10[%c1, %c0_11, %c0_12], %17 {strides = array<i32>} : memref<2x16x128xf32, #tpu.memory_space<vmem>>, vector<1x16x128xf32>,
    %c0_13 = arith.constant 0 : index
    %c0_14 = arith.constant 0 : index
    %c0_15 = arith.constant 0 : index
    %18 = vector.load %arg10[%c0_13, %c0_14, %c0_15] : memref<2x16x128xf32, #tpu.memory_space<vmem>>, vector<2x16x128xf32>
    %19 = tpu.iota {dimensions = array<i32: 1>} : vector<16x128xi32>
    %c0_16 = arith.constant 0 : index
    %c0_17 = arith.constant 0 : index
    %20 = vector.load %arg7[%c0_16, %c0_17] : memref<16x1xi32, #tpu.memory_space<vmem>>, vector<16x1xi32>
    %21 = vector.broadcast %20 : vector<16x1xi32> to vector<16x128xi32>
    %22 = arith.cmpi sge, %19, %21 : vector<16x128xi32>
    %c0_18 = arith.constant 0 : index
    %c0_19 = arith.constant 0 : index
    %23 = vector.load %arg8[%c0_18, %c0_19] : memref<16x1xi32, #tpu.memory_space<vmem>>, vector<16x1xi32>
    %24 = vector.broadcast %23 : vector<16x1xi32> to vector<16x128xi32>
    %25 = arith.cmpi slt, %19, %24 : vector<16x128xi32>
    %26 = arith.andi %22, %25 : vector<16x128xi1>
    %27 = arith.extui %26 : vector<16x128xi1> to vector<16x128xi32>
    %28 = arith.sitofp %27 : vector<16x128xi32> to vector<16x128xf32>
    %29 = vector.shape_cast %28 : vector<16x128xf32> to vector<1x16x128xf32>
    %30 = vector.broadcast %29 : vector<1x16x128xf32> to vector<2x16x128xf32>
    %31 = arith.mulf %18, %30 : vector<2x16x128xf32>
    %cst_20 = arith.constant dense<0.000000e+00> : vector<2x16xf32>
    %32 = vector.multi_reduction <add>, %31, %cst_20 [2] : vector<2x16x128xf32> to vector<2x16xf32>
    %33 = vector.shape_cast %32 : vector<2x16xf32> to vector<2x16x1xf32>
    %cst_21 = arith.constant dense<0.000000e+00> : vector<16x1xf32>
    %34 = vector.multi_reduction <add>, %33, %cst_21 [0] : vector<2x16x1xf32> to vector<16x1xf32>
    %35 = vector.shape_cast %34 : vector<16x1xf32> to vector<1x16x1xf32>
    %c0_22 = arith.constant 0 : index
    %c0_23 = arith.constant 0 : index
    %36 = vector.load %arg6[%c0_22, %c0_23] : memref<16x1xf32, #tpu.memory_space<vmem>>, vector<16x1xf32>
    %37 = vector.shape_cast %36 : vector<16x1xf32> to vector<1x16x1xf32>
    %38 = arith.mulf %35, %37 : vector<1x16x1xf32>
    %39 = vector.broadcast %38 : vector<1x16x1xf32> to vector<2x16x128xf32>
    %40 = arith.subf %18, %39 : vector<2x16x128xf32>
    %41 = vector.shape_cast %28 : vector<16x128xf32> to vector<1x16x128xf32>
    %42 = vector.broadcast %41 : vector<1x16x128xf32> to vector<2x16x128xf32>
    %43 = arith.mulf %40, %42 : vector<2x16x128xf32>
    %44 = arith.mulf %43, %43 : vector<2x16x128xf32>
    %cst_24 = arith.constant dense<0.000000e+00> : vector<2x16xf32>
    %45 = vector.multi_reduction <add>, %44, %cst_24 [2] : vector<2x16x128xf32> to vector<2x16xf32>
    %46 = vector.shape_cast %45 : vector<2x16xf32> to vector<2x16x1xf32>
    %cst_25 = arith.constant dense<0.000000e+00> : vector<16x1xf32>
    %47 = vector.multi_reduction <add>, %46, %cst_25 [0] : vector<2x16x1xf32> to vector<16x1xf32>
    %48 = vector.shape_cast %47 : vector<16x1xf32> to vector<1x16x1xf32>
    %c0_26 = arith.constant 0 : index
    %c0_27 = arith.constant 0 : index
    %49 = vector.load %arg6[%c0_26, %c0_27] : memref<16x1xf32, #tpu.memory_space<vmem>>, vector<16x1xf32>
    %50 = vector.shape_cast %49 : vector<16x1xf32> to vector<1x16x1xf32>
    %51 = arith.mulf %48, %50 : vector<1x16x1xf32>
    %c0_28 = arith.constant 0 : index
    %c0_29 = arith.constant 0 : index
    %52 = vector.load %arg4[%c0_28, %c0_29] : memref<16x1xf32, #tpu.memory_space<vmem>>, vector<16x1xf32>
    %cst_30 = arith.constant 9.99999974E-6 : f32
    %53 = vector.broadcast %cst_30 : f32 to vector<1x16x1xf32>
    %54 = arith.addf %51, %53 : vector<1x16x1xf32>
    %55 = math.rsqrt %54 : vector<1x16x1xf32>
    %56 = vector.shape_cast %52 : vector<16x1xf32> to vector<1x16x1xf32>
    %57 = arith.mulf %56, %55 : vector<1x16x1xf32>
    %58 = vector.broadcast %38 : vector<1x16x1xf32> to vector<2x16x128xf32>
    %59 = arith.subf %18, %58 : vector<2x16x128xf32>
    %60 = vector.broadcast %57 : vector<1x16x1xf32> to vector<2x16x128xf32>
    %61 = arith.mulf %59, %60 : vector<2x16x128xf32>
    %c0_31 = arith.constant 0 : index
    %c0_32 = arith.constant 0 : index
    %62 = vector.load %arg5[%c0_31, %c0_32] : memref<16x1xf32, #tpu.memory_space<vmem>>, vector<16x1xf32>
    %63 = vector.shape_cast %62 : vector<16x1xf32> to vector<1x16x1xf32>
    %64 = vector.broadcast %63 : vector<1x16x1xf32> to vector<2x16x128xf32>
    %65 = arith.addf %61, %64 : vector<2x16x128xf32>
    %cst_33 = arith.constant 0.000000e+00 : f32
    %66 = vector.broadcast %cst_33 : f32 to vector<2x16x128xf32>
    %67 = arith.maximumf %65, %66 : vector<2x16x128xf32>
    %68 = vector.shape_cast %28 : vector<16x128xf32> to vector<1x16x128xf32>
    %69 = vector.broadcast %68 : vector<1x16x128xf32> to vector<2x16x128xf32>
    %70 = arith.mulf %67, %69 : vector<2x16x128xf32>
    %71 = arith.truncf %70 : vector<2x16x128xf32> to vector<2x16x128xbf16>
    %c0_34 = arith.constant 0 : index
    %c0_35 = arith.constant 0 : index
    %c0_36 = arith.constant 0 : index
    %72 = vector.load %arg9[%c0_34, %c0_35, %c0_36] : memref<2x16x128xbf16, #tpu.memory_space<vmem>>, vector<2x16x128xbf16>
    tpu.vector_store %arg9[%c0_34, %c0_35, %c0_36], %71 {strides = array<i32>} : memref<2x16x128xbf16, #tpu.memory_space<vmem>>, vector<2x16x128xbf16>,
    return
  }
  func.func @transform_0(%arg0: i32) -> (i32, i32, i32) {
    %c0_i32 = arith.constant 0 : i32
    %c0_i32_0 = arith.constant 0 : i32
    %c0_i32_1 = arith.constant 0 : i32
    %c0_i32_2 = arith.constant 0 : i32
    return %c0_i32, %c0_i32_0, %c0_i32_1 : i32, i32, i32
  }
  func.func @transform_1(%arg0: i32) -> (i32, i32) {
    %c0_i32 = arith.constant 0 : i32
    %c0_i32_0 = arith.constant 0 : i32
    %c0_i32_1 = arith.constant 0 : i32
    return %c0_i32, %c0_i32_0 : i32, i32
  }
  func.func @transform_2(%arg0: i32) -> (i32, i32) {
    %c0_i32 = arith.constant 0 : i32
    %c0_i32_0 = arith.constant 0 : i32
    %c0_i32_1 = arith.constant 0 : i32
    return %c0_i32, %c0_i32_0 : i32, i32
  }
  func.func @transform_3(%arg0: i32) -> (i32, i32) {
    %c0_i32 = arith.constant 0 : i32
    %c0_i32_0 = arith.constant 0 : i32
    %c0_i32_1 = arith.constant 0 : i32
    return %c0_i32, %c0_i32_0 : i32, i32
  }
  func.func @transform_4(%arg0: i32) -> (i32, i32) {
    %c0_i32 = arith.constant 0 : i32
    %c0_i32_0 = arith.constant 0 : i32
    %c0_i32_1 = arith.constant 0 : i32
    return %c0_i32, %c0_i32_0 : i32, i32
  }
  func.func @transform_5(%arg0: i32) -> (i32, i32) {
    %c0_i32 = arith.constant 0 : i32
    %c0_i32_0 = arith.constant 0 : i32
    %c0_i32_1 = arith.constant 0 : i32
    return %c0_i32, %c0_i32_0 : i32, i32
  }
  func.func @transform_6(%arg0: i32) -> (i32, i32) {
    %c0_i32 = arith.constant 0 : i32
    %c0_i32_0 = arith.constant 0 : i32
    %c0_i32_1 = arith.constant 0 : i32
    return %c0_i32, %c0_i32_0 : i32, i32
  }
  func.func @transform_7(%arg0: i32) -> (i32, i32) {
    %c0_i32 = arith.constant 0 : i32
    %c0_i32_0 = arith.constant 0 : i32
    %c0_i32_1 = arith.constant 0 : i32
    return %c0_i32, %c0_i32_0 : i32, i32
  }
  func.func @transform_8(%arg0: i32) -> (i32, i32, i32) {
    %c0_i32 = arith.constant 0 : i32
    %c0_i32_0 = arith.constant 0 : i32
    %c0_i32_1 = arith.constant 0 : i32
    %c0_i32_2 = arith.constant 0 : i32
    return %c0_i32, %c0_i32_0, %c0_i32_1 : i32, i32, i32
  }
}

module attributes {stable_mosaic.version = 11 : i64} {
  func.func @kernel(%arg0: i32, %arg1: memref<2x16x128xbf16, #tpu.memory_space<vmem>>, %arg2: memref<128x256xbf16, #tpu.memory_space<vmem>>, %arg3: memref<2x16x256xbf16, #tpu.memory_space<vmem>>) attributes {dimension_semantics = [#tpu.dimension_semantics<parallel>], iteration_bounds = array<i64: 1>, scalar_prefetch = 0 : i64, scratch_operands = 0 : i64, tpu.core_type = #tpu.core_type<tc>, window_params = [{pipeline_mode = #tpu.pipeline_mode<synchronous>, transform_indices = @transform_0, window_bounds = array<i64: 2, 16, 128>}, {transform_indices = @transform_1, window_bounds = array<i64: 128, 256>}, {transform_indices = @transform_2, window_bounds = array<i64: 2, 16, 256>}]} {
    %c0 = arith.constant 0 : index
    %c0_0 = arith.constant 0 : index
    %c0_1 = arith.constant 0 : index
    %0 = vector.load %arg1[%c0, %c0_0, %c0_1] : memref<2x16x128xbf16, #tpu.memory_space<vmem>>, vector<2x16x128xbf16>
    %1 = vector.shape_cast %0 : vector<2x16x128xbf16> to vector<32x128xbf16>
    %c0_2 = arith.constant 0 : index
    %c0_3 = arith.constant 0 : index
    %2 = vector.load %arg2[%c0_2, %c0_3] : memref<128x256xbf16, #tpu.memory_space<vmem>>, vector<128x256xbf16>
    %cst = arith.constant dense<0.000000e+00> : vector<32x256xf32>
    %3 = tpu.matmul %1, %2, %cst {dimension_numbers = #tpu.dot_dimension_numbers<[1], [0], [0], [1], [0, 0, 1, 1], [], []>} : vector<32x128xbf16>, vector<128x256xbf16>, vector<32x256xf32> -> vector<32x256xf32>
    %4 = vector.shape_cast %3 : vector<32x256xf32> to vector<2x16x256xf32>
    %5 = arith.truncf %4 : vector<2x16x256xf32> to vector<2x16x256xbf16>
    %c0_4 = arith.constant 0 : index
    %c0_5 = arith.constant 0 : index
    %c0_6 = arith.constant 0 : index
    %6 = vector.load %arg3[%c0_4, %c0_5, %c0_6] : memref<2x16x256xbf16, #tpu.memory_space<vmem>>, vector<2x16x256xbf16>
    tpu.vector_store %arg3[%c0_4, %c0_5, %c0_6], %5 {strides = array<i32>} : memref<2x16x256xbf16, #tpu.memory_space<vmem>>, vector<2x16x256xbf16>,
    return
  }
  func.func @transform_0(%arg0: i32) -> (i32, i32, i32) {
    %c0_i32 = arith.constant 0 : i32
    %c0_i32_0 = arith.constant 0 : i32
    %c0_i32_1 = arith.constant 0 : i32
    %c0_i32_2 = arith.constant 0 : i32
    return %c0_i32, %c0_i32_0, %c0_i32_1 : i32, i32, i32
  }
  func.func @transform_1(%arg0: i32) -> (i32, i32) {
    %c0_i32 = arith.constant 0 : i32
    %c0_i32_0 = arith.constant 0 : i32
    return %c0_i32, %arg0 : i32, i32
  }
  func.func @transform_2(%arg0: i32) -> (i32, i32, i32) {
    %c0_i32 = arith.constant 0 : i32
    %c0_i32_0 = arith.constant 0 : i32
    %c0_i32_1 = arith.constant 0 : i32
    return %c0_i32, %c0_i32_0, %arg0 : i32, i32, i32
  }
}

</mosaic_0001>

<llo_original>
// kernel: a_call__.3
$region0: #{a_call__.3}
  #allocation0 [shape = 'u32[]', space=smem, size = 0x4, offset = 0x4, fixed_abs, tag = 'smem constant byte address 0x4 - core index']
  #allocation1 [shape = 'u32[144,128]{1,0:T(1,128)}', space=vmem, size = 0x12000, scoped, tag = 'internal scratch']
  %s0 = inlined_call_operand.vmem [shape: f32[8,256], index: 0, kind: input, shape index: {}]
  %s1 = inlined_call_operand.vmem [shape: bf16[256,128], index: 1, kind: input, shape index: {}]
  %s2 = inlined_call_operand.vmem [shape: f32[2,8,128], index: 2, kind: output, shape index: {}]
  %s3 = sld [smem:[#allocation0]]
  $region45: #{a_call__.3} parent=0
    _
  %s5 = ssub.s32 1, %s3
  %s6 = scalar_select 0, %s5, %s3
  loop: start=0, step=1, limit=4
  $region2: #{a_call__.3} parent=0 // loop_pre_header
    _
  $region3: #{a_call__.3} parent=0 // loop_header
    %s8 = sphi 0, %s12
    %p9 = scmp.ge.s32.totalorder %s8, 4
    %s15 = sphi 0, %s27
    %s16 = sphi 0, %s23
    %s17 = sphi 0, %s15
    %s18 = sphi 0, %s16
    %s19 = sphi 0, %s17
    %s20 = sphi 0, %s18
    %s32 = sphi 0, %s34
    %s35 = sphi 0, %s32
    %s36 = sphi 0, %s35
    %s52 = sphi 0, %s36
    %s60 = sphi 0, %s62
    %s63 = sphi 0, %s60
    %s64 = sphi 0, %s63
    %s80 = sphi 0, %s64
    %s86 = sphi 0, %s88
    %s89 = sphi 0, %s86
    %s90 = sphi 0, %s89
    %s106 = sphi 0, %s90
  $region4: #{a_call__.3} parent=0 // loop_header_branch
    %11 = sbr.rel (%p9) target = $region8
  $region5: #{a_call__.3} parent=0 // loop_body
    %s13 = ssub.s32 %s8, 1
    %s14 = ssub.s32 %s8, 2
    %s21 = sadd.s32 1, %s16
    %p22 = scmp.ge.s32.totalorder %s21, 1
    %s23 = scalar_select %p22, 0, %s21
    %s24 = sadd.s32 1, %s15
    %s25 = scalar_select %p22, %s24, %s15
    %p26 = scmp.ge.s32.totalorder %s25, 2
    %s27 = scalar_select %p26, 0, %s25
    %s28 = sadd.s32 %s15, %s16
    %s29 = sadd.s32 %s27, %s23
    %s30 = ssub.s32 %s28, %s29
    %p31 = scmp.eq.s32.totalorder %s30, 0
    %s33 = sadd.s32 %s32, 1
    %s34 = scalar_select %p31, %s32, %s33
    %p37 = pneg %p31
    %p38 = scmp.eq.s32.totalorder %s8, 1
    %p39 = por %p37, %p38
    %p40 = scmp.ne.s32.totalorder %s32, %s35
    %p41 = scmp.eq.s32.totalorder %s8, 0
    %p42 = por %p40, %p41
    %p43 = scmp.ne.s32.totalorder %s32, %s35
    %p44 = scmp.eq.s32.totalorder %s13, 1
    %p45 = por %p43, %p44
    %p46 = scmp.ne.s32.totalorder %s35, %s36
    %p47 = scmp.eq.s32.totalorder %s13, 0
    %p48 = por %p46, %p47
    %p49 = scmp.ne.s32.totalorder %s35, %s36
    %p50 = scmp.eq.s32.totalorder %s14, 1
    %p51 = por %p49, %p50
    %p53 = scmp.ne.s32.totalorder %s36, %s52
    %p54 = scmp.eq.s32.totalorder %s14, 0
    %p55 = por %p53, %p54
    %s56 = sadd.s32 %s15, %s16
    %s57 = sadd.s32 %s27, %s23
    %s58 = ssub.s32 %s56, %s57
    %p59 = scmp.eq.s32.totalorder %s58, 0
    %s61 = sadd.s32 %s60, 1
    %s62 = scalar_select %p59, %s60, %s61
    %p65 = pneg %p59
    %p66 = scmp.eq.s32.totalorder %s8, 1
    %p67 = por %p65, %p66
    %p68 = scmp.ne.s32.totalorder %s60, %s63
    %p69 = scmp.eq.s32.totalorder %s8, 0
    %p70 = por %p68, %p69
    %p71 = scmp.ne.s32.totalorder %s60, %s63
    %p72 = scmp.eq.s32.totalorder %s13, 1
    %p73 = por %p71, %p72
    %p74 = scmp.ne.s32.totalorder %s63, %s64
    %p75 = scmp.eq.s32.totalorder %s13, 0
    %p76 = por %p74, %p75
    %p77 = scmp.ne.s32.totalorder %s63, %s64
    %p78 = scmp.eq.s32.totalorder %s14, 1
    %p79 = por %p77, %p78
    %p81 = scmp.ne.s32.totalorder %s64, %s80
    %p82 = scmp.eq.s32.totalorder %s14, 0
    %p83 = por %p81, %p82
    %s84 = ssub.s32 %s15, %s27
    %p85 = scmp.eq.s32.totalorder %s84, 0
    %s87 = sadd.s32 %s86, 1
    %s88 = scalar_select %p85, %s86, %s87
    %p91 = pneg %p85
    %p92 = scmp.eq.s32.totalorder %s8, 1
    %p93 = por %p91, %p92
    %p94 = scmp.ne.s32.totalorder %s86, %s89
    %p95 = scmp.eq.s32.totalorder %s8, 0
    %p96 = por %p94, %p95
    %p97 = scmp.ne.s32.totalorder %s86, %s89
    %p98 = scmp.eq.s32.totalorder %s13, 1
    %p99 = por %p97, %p98
    %p100 = scmp.ne.s32.totalorder %s89, %s90
    %p101 = scmp.eq.s32.totalorder %s13, 0
    %p102 = por %p100, %p101
    %p103 = scmp.ne.s32.totalorder %s89, %s90
    %p104 = scmp.eq.s32.totalorder %s14, 1
    %p105 = por %p103, %p104
    %p107 = scmp.ne.s32.totalorder %s90, %s106
    %p108 = scmp.eq.s32.totalorder %s14, 0
    %p109 = por %p107, %p108
    %p110 = scmp.le.s32.totalorder 1, %s8
    %p111 = scmp.lt.s32.totalorder %s8, 3
    %p112 = pnand %p110, %p111
    %p113 = pneg %p112
    // Predicated region
    $region9: #{a_call__.3} parent=5 // pred_check
      _
    $region10: #{a_call__.3} parent=5 // pred_check_branch
      %115 = sbr.rel (%p112) target = $region12
    $region11: #{a_call__.3} parent=5 // pred_region
      %s116 = ssub.s32 %s8, 1
    $region12: #{a_call__.3} parent=5 // pred_fallthru
      _
    %p117 = scmp.lt.s32.totalorder %s8, 2
    // Predicated region
    $region13: #{a_call__.3} parent=5 // pred_check
      %p118 = pneg %p117
    $region14: #{a_call__.3} parent=5 // pred_check_branch
      %120 = sbr.rel (%p118) target = $region16
    $region15: #{a_call__.3} parent=5 // pred_region
      // Predicated region
      $region17: #{a_call__.3} parent=15 // pred_check
        %p121 = pneg %p42
      $region18: #{a_call__.3} parent=15 // pred_check_branch
        %123 = sbr.rel (%p121) target = $region20
      $region19: #{a_call__.3} parent=15 // pred_region
        %s124 = sadd.s32 %s15, %s16
        %p125 = scmp.lt.s32.totalorder %s124, 1
        %s126 = scalar_select %p125, %s124, 1
        %s127 = smul.addr %s126, 8
        %s128 = scalar_lea.vmem %s0, %s127
        %s129 = sadd.s32 %s15, %s16
      $region20: #{a_call__.3} parent=15 // pred_fallthru
        _
      // Predicated region
      $region21: #{a_call__.3} parent=15 // pred_check
        %p130 = pneg %p70
      $region22: #{a_call__.3} parent=15 // pred_check_branch
        %132 = sbr.rel (%p130) target = $region24
      $region23: #{a_call__.3} parent=15 // pred_region
        %s133 = sadd.s32 %s15, %s16
        %s134 = smul.u32 16, %s133
        %p135 = scmp.lt.s32.totalorder %s134, 31
        %s136 = scalar_select %p135, %s134, 31
        %s137 = smul.addr %s136, 4
        %s138 = scalar_lea.vmem %s1, %s137
        %s139 = sadd.s32 %s15, %s16
        %s140 = smul.u32 16, %s139
      $region24: #{a_call__.3} parent=15 // pred_fallthru
        _
    $region16: #{a_call__.3} parent=5 // pred_fallthru
      _
    %p141 = scmp.le.s32.totalorder 1, %s8
    %p142 = scmp.lt.s32.totalorder %s8, 3
    %p143 = pnand %p141, %p142
    %p144 = pneg %p143
    // Predicated region
    $region25: #{a_call__.3} parent=5 // pred_check
      _
    $region26: #{a_call__.3} parent=5 // pred_check_branch
      %146 = sbr.rel (%p143) target = $region28
    $region27: #{a_call__.3} parent=5 // pred_region
      %s147 = ssub.s32 %s8, 1
      %s148 = sadd.s32 %s17, %s18
      %p149 = scmp.lt.s32.totalorder %s148, 1
      %s150 = scalar_select %p149, %s148, 1
      %s151 = smul.addr %s150, 8
      %s152 = scalar_lea.vmem %s0, %s151
      %p153 = pneg %p48
      %p154 = pneg %p45
      %s155 = sadd.s32 %s17, %s18
      %s156 = smul.u32 16, %s155
      %p157 = scmp.lt.s32.totalorder %s156, 31
      %s158 = scalar_select %p157, %s156, 31
      %s159 = smul.addr %s158, 4
      %s160 = scalar_lea.vmem %s1, %s159
      %p161 = pneg %p76
      %p162 = pneg %p73
      %p163 = pneg %p102
      %p164 = pneg %p99
      %p165 = scmp.lt.s32.totalorder %s17, 1
      %s166 = scalar_select %p165, %s17, 1
      %s167 = smul.addr %s166, 8
      %s168 = scalar_lea.vmem %s2, %s167
      %s169 = sadd.s32 %s17, %s18
      %p170 = scmp.lt.s32.totalorder %s169, 1
      %s171 = scalar_select %p170, %s169, 1
      %s172 = smul.addr %s171, 8
      %s173 = scalar_lea.vmem %s0, %s172
      %s174 = sadd.s32 %s17, %s18
      %s175 = sadd.s32 %s17, %s18
      %s176 = smul.u32 16, %s175
      %p177 = scmp.lt.s32.totalorder %s176, 31
      %s178 = scalar_select %p177, %s176, 31
      %s179 = smul.addr %s178, 4
      %s180 = scalar_lea.vmem %s1, %s179
      %s181 = sadd.s32 %s17, %s18
      %s182 = smul.u32 16, %s181
      %p183 = scmp.lt.s32.totalorder %s17, 1
      %s184 = scalar_select %p183, %s17, 1
      %s185 = smul.addr %s184, 8
      %s186 = scalar_lea.vmem %s2, %s185
      %p188 = scmp.eq.s32.totalorder %s18, 0
      // Predicated region
      $region29: #{a_call__.3} parent=27 // pred_check
        %p189 = pneg %p188
      $region30: #{a_call__.3} parent=27 // pred_check_branch
        %191 = sbr.rel (%p189) target = $region32
      $region31: #{a_call__.3} parent=27 // pred_region
        %192 = vst [vmem:[%s186] sm:$0xff] 0.0
      $region32: #{a_call__.3} parent=27 // pred_fallthru
        _
      %s193 = sadd.s32 %s17, %s18
      %s194 = smul.u32 %s193, 128
      %v195 = vlaneseq
      %v196 = vand.u32 %v195, 127
      %v197 = vstv %s194
      %v198 = vadd.s32 %v197, %v196
      %vm199 = vcmp.lt.s32.totalorder %v198, 256
      %v200 = vld [vmem:[%s173] sm:$0xff]
      %v201 = vsel %vm199, 1, 0
      %vm202 = vcmp.eq.s32.totalorder %v201, 1
      %v203 = vsel %vm202, %v200, 0.0
      %v204 = vpack.c.bf16 %v203, %v203
      %v205 = vld [vmem:[%s186] sm:$0xff]
      %v206 = vld [vmem:[%s180] sm:$0xf]
      %v207 = vld [vmem:[%s180 + $0x4] sm:$0xf]
      %v208 = vld [vmem:[%s180 + $0x8] sm:$0xf]
      %v209 = vld [vmem:[%s180 + $0xc] sm:$0xf]
      %v210 = vld [vmem:[%s180 + $0x10] sm:$0xf]
      %v211 = vld [vmem:[%s180 + $0x14] sm:$0xf]
      %v212 = vld [vmem:[%s180 + $0x18] sm:$0xf]
      %v213 = vld [vmem:[%s180 + $0x1c] sm:$0xf]
      %v214 = vld [vmem:[%s180 + $0x20] sm:$0xf]
      %v215 = vld [vmem:[%s180 + $0x24] sm:$0xf]
      %v216 = vld [vmem:[%s180 + $0x28] sm:$0xf]
      %v217 = vld [vmem:[%s180 + $0x2c] sm:$0xf]
      %v218 = vld [vmem:[%s180 + $0x30] sm:$0xf]
      %v219 = vld [vmem:[%s180 + $0x34] sm:$0xf]
      %v220 = vld [vmem:[%s180 + $0x38] sm:$0xf]
      %v221 = vld [vmem:[%s180 + $0x3c] sm:$0xf]
      %v238 = vunpack.c.l.b16 %v206
      %v239 = vunpack.c.l.b16 %v207
      %v240 = vunpack.c.l.b16 %v208
      %v241 = vunpack.c.l.b16 %v209
      %v242 = vunpack.c.l.b16 %v210
      %v243 = vunpack.c.l.b16 %v211
      %v244 = vunpack.c.l.b16 %v212
      %v245 = vunpack.c.l.b16 %v213
      %v246 = vunpack.c.l.b16 %v214
      %v247 = vunpack.c.l.b16 %v215
      %v248 = vunpack.c.l.b16 %v216
      %v249 = vunpack.c.l.b16 %v217
      %v250 = vunpack.c.l.b16 %v218
      %v251 = vunpack.c.l.b16 %v219
      %v252 = vunpack.c.l.b16 %v220
      %v253 = vunpack.c.l.b16 %v221
      %v254 = vpack.c.b16 %v239, %v238
      %v255 = vpack.c.b16 %v241, %v240
      %v256 = vpack.c.b16 %v243, %v242
      %v257 = vpack.c.b16 %v245, %v244
      %v258 = vpack.c.b16 %v247, %v246
      %v259 = vpack.c.b16 %v249, %v248
      %v260 = vpack.c.b16 %v251, %v250
      %v261 = vpack.c.b16 %v253, %v252
      %270 = vmatprep.subr.bf16.mxu0 0
      %271 = vmatpush1.bf16.msra.mxu0 %v254
      %272 = vmatprep.subr.bf16.mxu0 0
      %273 = vmatpush1.bf16.msra.mxu0 %v255
      %274 = vmatprep.subr.bf16.mxu0 0
      %275 = vmatpush1.bf16.msra.mxu0 %v256
      %276 = vmatprep.subr.bf16.mxu0 0
      %277 = vmatpush1.bf16.msra.mxu0 %v257
      %278 = vmatprep.subr.bf16.mxu0 0
      %279 = vmatpush1.bf16.msra.mxu0 %v258
      %280 = vmatprep.subr.bf16.mxu0 0
      %281 = vmatpush1.bf16.msra.mxu0 %v259
      %282 = vmatprep.subr.bf16.mxu0 0
      %283 = vmatpush1.bf16.msra.mxu0 %v260
      %284 = vmatprep.subr.bf16.mxu0 0
      %285 = vmatpush1.bf16.msra.mxu0 %v261
      %286 = vmatprep.subr.bf16.mxu0 0
      %287 = vmatpush1.bf16.msra.mxu0 0
      %288 = vmatprep.subr.bf16.mxu0 0
      %289 = vmatpush1.bf16.msra.mxu0 0
      %290 = vmatprep.subr.bf16.mxu0 0
      %291 = vmatpush1.bf16.msra.mxu0 0
      %292 = vmatprep.subr.bf16.mxu0 0
      %293 = vmatpush1.bf16.msra.mxu0 0
      %294 = vmatprep.subr.bf16.mxu0 0
      %295 = vmatpush1.bf16.msra.mxu0 0
      %296 = vmatprep.subr.bf16.mxu0 0
      %297 = vmatpush1.bf16.msra.mxu0 0
      %298 = vmatprep.subr.bf16.mxu0 0
      %299 = vmatpush1.bf16.msra.mxu0 0
      %300 = vmatprep.subr.bf16.mxu0 0
      %301 = vmatpush1.bf16.msra.mxu0 0
      %302 = vmatprep.mubr.bf16.mxu0 0
      %303 = vmatmul.mubr.bf16.gmra.mrb[0].mxu0 %v204
      %v304 = vpop.f32.mrb[0].mxu0
      %v305 = vadd.f32 0.0, %v304
      %v306 = vpop.f32.mrb[0].mxu0
      %v307 = vpop.f32.mrb[0].mxu0
      %v308 = vpop.f32.mrb[0].mxu0
      %309 = vdwg.mxu0
      %v310 = vadd.f32 %v205, %v305
      %311 = vst [vmem:[%s186] sm:$0xff] %v310
      %p312 = scmp.lt.s32.totalorder %s17, 1
      %s313 = scalar_select %p312, %s17, 1
      %s314 = smul.addr %s313, 8
      %s315 = scalar_lea.vmem %s2, %s314
      // Predicated region
      $region33: #{a_call__.3} parent=27 // pred_check
        %p316 = pneg %p99
      $region34: #{a_call__.3} parent=27 // pred_check_branch
        %318 = sbr.rel (%p316) target = $region36
      $region35: #{a_call__.3} parent=27 // pred_region
        _
      $region36: #{a_call__.3} parent=27 // pred_fallthru
        _
    $region28: #{a_call__.3} parent=5 // pred_fallthru
      _
    %p319 = scmp.le.s32.totalorder 2, %s8
    // Predicated region
    $region37: #{a_call__.3} parent=5 // pred_check
      %p320 = pneg %p319
    $region38: #{a_call__.3} parent=5 // pred_check_branch
      %322 = sbr.rel (%p320) target = $region40
    $region39: #{a_call__.3} parent=5 // pred_region
      %s323 = ssub.s32 %s8, 2
      // Predicated region
      $region41: #{a_call__.3} parent=39 // pred_check
        %p324 = pneg %p105
      $region42: #{a_call__.3} parent=39 // pred_check_branch
        %326 = sbr.rel (%p324) target = $region44
      $region43: #{a_call__.3} parent=39 // pred_region
        %p327 = scmp.lt.s32.totalorder %s19, 1
        %s328 = scalar_select %p327, %s19, 1
        %s329 = smul.addr %s328, 8
        %s330 = scalar_lea.vmem %s2, %s329
      $region44: #{a_call__.3} parent=39 // pred_fallthru
        _
    $region40: #{a_call__.3} parent=5 // pred_fallthru
      _
  $region6: #{a_call__.3} parent=0 // loop_footer
    %s12 = sadd.s32 1, %s8
  $region7: #{a_call__.3} parent=0 // loop_footer_branch
    %7 = sbr.rel target = $region3
  $region8: #{a_call__.3} parent=0 // loop_exit
    _

// kernel: a_call__.4
$region0: #{a_call__.4}
  #allocation0 [shape = 'u32[]', space=smem, size = 0x4, offset = 0x4, fixed_abs, tag = 'smem constant byte address 0x4 - core index']
  #allocation1 [shape = 'u32[144,128]{1,0:T(1,128)}', space=vmem, size = 0x12000, scoped, tag = 'internal scratch']
  #allocation2 [shape = 'f32[2,16,128]{2,1,0:T(8,128)}', space=vmem, size = 0x4000, scoped, tag = 'scratch operand']
  %s0 = inlined_call_operand.vmem [shape: f32[2,8,128], index: 0, kind: input, shape index: {}]
  %s1 = inlined_call_operand.vmem [shape: bf16[16,4], index: 1, kind: input, shape index: {}]
  %s2 = inlined_call_operand.vmem [shape: f32[1,128], index: 2, kind: input, shape index: {}]
  %s3 = inlined_call_operand.vmem [shape: f32[16,1], index: 3, kind: input, shape index: {}]
  %s4 = inlined_call_operand.vmem [shape: f32[16,1], index: 4, kind: input, shape index: {}]
  %s5 = inlined_call_operand.vmem [shape: f32[16,1], index: 5, kind: input, shape index: {}]
  %s6 = inlined_call_operand.vmem [shape: s32[16,1], index: 6, kind: input, shape index: {}]
  %s7 = inlined_call_operand.vmem [shape: s32[16,1], index: 7, kind: input, shape index: {}]
  %s8 = inlined_call_operand.vmem [shape: bf16[2,16,128], index: 8, kind: output, shape index: {}]
  %s9 = sld [smem:[#allocation0]]
  $region42: #{a_call__.4} parent=0
    _
  %s11 = ssub.s32 1, %s9
  %s12 = scalar_select 0, %s11, %s9
  // Predicated region
  $region2: #{a_call__.4} parent=0 // pred_check
    _
  $region3: #{a_call__.4} parent=0 // pred_check_branch
    %14 = sbr.rel (0) target = $region5
  $region4: #{a_call__.4} parent=0 // pred_region
    _
  $region5: #{a_call__.4} parent=0 // pred_fallthru
    _
  // Predicated region
  $region6: #{a_call__.4} parent=0 // pred_check
    _
  $region7: #{a_call__.4} parent=0 // pred_check_branch
    %16 = sbr.rel (0) target = $region9
  $region8: #{a_call__.4} parent=0 // pred_region
    _
  $region9: #{a_call__.4} parent=0 // pred_fallthru
    _
  // Predicated region
  $region10: #{a_call__.4} parent=0 // pred_check
    _
  $region11: #{a_call__.4} parent=0 // pred_check_branch
    %18 = sbr.rel (0) target = $region13
  $region12: #{a_call__.4} parent=0 // pred_region
    _
  $region13: #{a_call__.4} parent=0 // pred_fallthru
    _
  // Predicated region
  $region14: #{a_call__.4} parent=0 // pred_check
    _
  $region15: #{a_call__.4} parent=0 // pred_check_branch
    %20 = sbr.rel (0) target = $region17
  $region16: #{a_call__.4} parent=0 // pred_region
    _
  $region17: #{a_call__.4} parent=0 // pred_fallthru
    _
  // Predicated region
  $region18: #{a_call__.4} parent=0 // pred_check
    _
  $region19: #{a_call__.4} parent=0 // pred_check_branch
    %22 = sbr.rel (0) target = $region21
  $region20: #{a_call__.4} parent=0 // pred_region
    _
  $region21: #{a_call__.4} parent=0 // pred_fallthru
    _
  // Predicated region
  $region22: #{a_call__.4} parent=0 // pred_check
    _
  $region23: #{a_call__.4} parent=0 // pred_check_branch
    %24 = sbr.rel (0) target = $region25
  $region24: #{a_call__.4} parent=0 // pred_region
    _
  $region25: #{a_call__.4} parent=0 // pred_fallthru
    _
  // Predicated region
  $region26: #{a_call__.4} parent=0 // pred_check
    _
  $region27: #{a_call__.4} parent=0 // pred_check_branch
    %26 = sbr.rel (0) target = $region29
  $region28: #{a_call__.4} parent=0 // pred_region
    _
  $region29: #{a_call__.4} parent=0 // pred_fallthru
    _
  // Predicated region
  $region30: #{a_call__.4} parent=0 // pred_check
    _
  $region31: #{a_call__.4} parent=0 // pred_check_branch
    %28 = sbr.rel (0) target = $region33
  $region32: #{a_call__.4} parent=0 // pred_region
    _
  $region33: #{a_call__.4} parent=0 // pred_fallthru
    _
  %v30 = vld [vmem:[%s0] sm:$0xff]
  %v31 = vld [vmem:[%s0 + $0x8] sm:$0xff]
  %v32 = vadd.f32 %v30, %v31
  %v33 = vld [vmem:[%s2] sm:$0x1]
  %v35 = vlaneseq
  %v36 = vshrl.u32 %v35, 7
  %v37 = vsub.s32 0, %v36
  %v38 = vrot.slane %v33, %v37
  %v40 = vmul.f32 %v32, %v38
  %v41 = vld [vmem:[%s1] sm:$0xf]
  %v42 = vld [vmem:[%s1 + $0x4] sm:$0xf]
  %v43 = vpack.c.bf16 %v40, %v40
  %v46 = vunpack.c.l.b16 %v41
  %v47 = vunpack.c.l.b16 %v42
  %v48 = vpack.c.b16 %v47, %v46
  %vm49 = vcmask 31744
  %v51 = vsel %vm49, %v48, 0
  %vm53 = vcmask 1041408
  %v55 = vsel %vm53, %v43, 0
  %57 = vmatprep.subr.bf16.mxu0 0
  %58 = vmatpush1.bf16.msra.mxu0 %v55
  %59 = vmatprep.subr.bf16.mxu0 0
  %60 = vmatpush1.bf16.msra.mxu0 0
  %61 = vmatprep.subr.bf16.mxu0 0
  %62 = vmatpush1.bf16.msra.mxu0 0
  %63 = vmatprep.subr.bf16.mxu0 0
  %64 = vmatpush1.bf16.msra.mxu0 0
  %65 = vmatprep.subr.bf16.mxu0 0
  %66 = vmatpush1.bf16.msra.mxu0 0
  %67 = vmatprep.subr.bf16.mxu0 0
  %68 = vmatpush1.bf16.msra.mxu0 0
  %69 = vmatprep.subr.bf16.mxu0 0
  %70 = vmatpush1.bf16.msra.mxu0 0
  %71 = vmatprep.subr.bf16.mxu0 0
  %72 = vmatpush1.bf16.msra.mxu0 0
  %73 = vmatprep.subr.bf16.mxu0 0
  %74 = vmatpush1.bf16.msra.mxu0 0
  %75 = vmatprep.subr.bf16.mxu0 0
  %76 = vmatpush1.bf16.msra.mxu0 0
  %77 = vmatprep.subr.bf16.mxu0 0
  %78 = vmatpush1.bf16.msra.mxu0 0
  %79 = vmatprep.subr.bf16.mxu0 0
  %80 = vmatpush1.bf16.msra.mxu0 0
  %81 = vmatprep.subr.bf16.mxu0 0
  %82 = vmatpush1.bf16.msra.mxu0 0
  %83 = vmatprep.subr.bf16.mxu0 0
  %84 = vmatpush1.bf16.msra.mxu0 0
  %85 = vmatprep.subr.bf16.mxu0 0
  %86 = vmatpush1.bf16.msra.mxu0 0
  %87 = vmatprep.subr.bf16.mxu0 0
  %88 = vmatpush1.bf16.msra.mxu0 0
  %89 = vmatprep.mubr.bf16.mxu0 0
  %90 = vmatmul.mubr.bf16.gmra.mrb[0].mxu0 %v51
  %v91 = vpop.f32.mrb[0].mxu0
  %v92 = vadd.f32 0.0, %v91
  %v93 = vpop.f32.mrb[0].mxu0
  %v94 = vpop.f32.mrb[0].mxu0
  %v95 = vadd.f32 0.0, %v94
  %v96 = vpop.f32.mrb[0].mxu0
  %97 = vdwg.mxu0
  %98 = vst [vmem:[#allocation2] sm:$0xff] %v92
  %99 = vst [vmem:[#allocation2 + $0x8] sm:$0xff] %v95
  %v101 = vrot.slane %v43, 2
  %v103 = vsel %vm53, %v101, 0
  %105 = vmatprep.subr.bf16.mxu0 0
  %106 = vmatpush1.bf16.msra.mxu0 %v103
  %107 = vmatprep.subr.bf16.mxu0 0
  %108 = vmatpush1.bf16.msra.mxu0 0
  %109 = vmatprep.subr.bf16.mxu0 0
  %110 = vmatpush1.bf16.msra.mxu0 0
  %111 = vmatprep.subr.bf16.mxu0 0
  %112 = vmatpush1.bf16.msra.mxu0 0
  %113 = vmatprep.subr.bf16.mxu0 0
  %114 = vmatpush1.bf16.msra.mxu0 0
  %115 = vmatprep.subr.bf16.mxu0 0
  %116 = vmatpush1.bf16.msra.mxu0 0
  %117 = vmatprep.subr.bf16.mxu0 0
  %118 = vmatpush1.bf16.msra.mxu0 0
  %119 = vmatprep.subr.bf16.mxu0 0
  %120 = vmatpush1.bf16.msra.mxu0 0
  %121 = vmatprep.subr.bf16.mxu0 0
  %122 = vmatpush1.bf16.msra.mxu0 0
  %123 = vmatprep.subr.bf16.mxu0 0
  %124 = vmatpush1.bf16.msra.mxu0 0
  %125 = vmatprep.subr.bf16.mxu0 0
  %126 = vmatpush1.bf16.msra.mxu0 0
  %127 = vmatprep.subr.bf16.mxu0 0
  %128 = vmatpush1.bf16.msra.mxu0 0
  %129 = vmatprep.subr.bf16.mxu0 0
  %130 = vmatpush1.bf16.msra.mxu0 0
  %131 = vmatprep.subr.bf16.mxu0 0
  %132 = vmatpush1.bf16.msra.mxu0 0
  %133 = vmatprep.subr.bf16.mxu0 0
  %134 = vmatpush1.bf16.msra.mxu0 0
  %135 = vmatprep.subr.bf16.mxu0 0
  %136 = vmatpush1.bf16.msra.mxu0 0
  %137 = vmatprep.mubr.bf16.mxu0 0
  %138 = vmatmul.mubr.bf16.gmra.mrb[0].mxu0 %v51
  %v139 = vpop.f32.mrb[0].mxu0
  %v140 = vadd.f32 0.0, %v139
  %v141 = vpop.f32.mrb[0].mxu0
  %v142 = vpop.f32.mrb[0].mxu0
  %v143 = vadd.f32 0.0, %v142
  %v144 = vpop.f32.mrb[0].mxu0
  %145 = vdwg.mxu0
  %s146 = scalar_lea.vmem [#allocation2], 16
  %147 = vst [vmem:[%s146] sm:$0xff] %v140
  %148 = vst [vmem:[%s146 + $0x8] sm:$0xff] %v143
  %v149 = vld [vmem:[#allocation2] sm:$0xff]
  %v150 = vld [vmem:[#allocation2 + $0x8] sm:$0xff]
  %v151 = vld [vmem:[#allocation2 + $0x10] sm:$0xff]
  %v152 = vld [vmem:[#allocation2 + $0x18] sm:$0xff]
  %v153 = vlaneseq
  %v154 = vand.u32 %v153, 127
  %v155 = vld [vmem:[%s6] sm:$0xff]
  %v156 = vld [vmem:[%s6 + $0x8] sm:$0xff]
  %157 = vset.pattern.permute.xlu0 0
  %158 = vperm.xlu0 %157, %v155
  %v159 = vpop.permute.xlu0 %158
  %160 = vset.pattern.permute.xlu0 0
  %161 = vperm.xlu0 %160, %v156
  %v162 = vpop.permute.xlu0 %161
  %vm163 = vcmp.ge.s32.totalorder %v154, %v159
  %vm164 = vcmp.ge.s32.totalorder %v154, %v162
  %v165 = vld [vmem:[%s7] sm:$0xff]
  %v166 = vld [vmem:[%s7 + $0x8] sm:$0xff]
  %167 = vset.pattern.permute.xlu0 0
  %168 = vperm.xlu0 %167, %v165
  %v169 = vpop.permute.xlu0 %168
  %170 = vset.pattern.permute.xlu0 0
  %171 = vperm.xlu0 %170, %v166
  %v172 = vpop.permute.xlu0 %171
  %vm173 = vcmp.lt.s32.totalorder %v154, %v169
  %vm174 = vcmp.lt.s32.totalorder %v154, %v172
  %vm175 = vmand %vm163, %vm173
  %vm176 = vmand %vm164, %vm174
  %v177 = vsel %vm175, 1, 0
  %v178 = vsel %vm176, 1, 0
  %v179 = vcvt.s32.f32 %v177
  %v180 = vcvt.s32.f32 %v178
  %v181 = vmul.f32 %v149, %v179
  %v182 = vmul.f32 %v150, %v180
  %v183 = vmul.f32 %v151, %v179
  %v184 = vmul.f32 %v152, %v180
  %185 = vadd.xlane.f32.xlu0 %v181
  %v186 = vpop.xlane.xlu0 %185
  %187 = vadd.xlane.f32.xlu0 %v182
  %v188 = vpop.xlane.xlu0 %187
  %189 = vadd.xlane.f32.xlu0 %v183
  %v190 = vpop.xlane.xlu0 %189
  %191 = vadd.xlane.f32.xlu0 %v184
  %v192 = vpop.xlane.xlu0 %191
  %v193 = vadd.f32 %v186, %v190
  %v194 = vadd.f32 %v188, %v192
  %v195 = vld [vmem:[%s5] sm:$0xff]
  %v196 = vld [vmem:[%s5 + $0x8] sm:$0xff]
  %v197 = vmul.f32 %v193, %v195
  %v198 = vmul.f32 %v194, %v196
  %200 = vset.pattern.permute.xlu0 0
  %201 = vperm.xlu0 %200, %v197
  %v202 = vpop.permute.xlu0 %201
  %205 = vset.pattern.permute.xlu0 0
  %206 = vperm.xlu0 %205, %v198
  %v207 = vpop.permute.xlu0 %206
  %v209 = vsub.f32 %v149, %v202
  %v210 = vsub.f32 %v150, %v207
  %v211 = vsub.f32 %v151, %v202
  %v212 = vsub.f32 %v152, %v207
  %v213 = vmul.f32 %v209, %v179
  %v214 = vmul.f32 %v210, %v180
  %v215 = vmul.f32 %v211, %v179
  %v216 = vmul.f32 %v212, %v180
  %v217 = vmul.f32 %v213, %v213
  %v218 = vmul.f32 %v214, %v214
  %v219 = vmul.f32 %v215, %v215
  %v220 = vmul.f32 %v216, %v216
  %221 = vadd.xlane.f32.xlu0 %v217
  %v222 = vpop.xlane.xlu0 %221
  %223 = vadd.xlane.f32.xlu0 %v218
  %v224 = vpop.xlane.xlu0 %223
  %225 = vadd.xlane.f32.xlu0 %v219
  %v226 = vpop.xlane.xlu0 %225
  %227 = vadd.xlane.f32.xlu0 %v220
  %v228 = vpop.xlane.xlu0 %227
  %v229 = vadd.f32 %v222, %v226
  %v230 = vadd.f32 %v224, %v228
  %v231 = vmul.f32 %v229, %v195
  %v232 = vmul.f32 %v230, %v196
  %v233 = vld [vmem:[%s3] sm:$0xff]
  %v234 = vld [vmem:[%s3 + $0x8] sm:$0xff]
  %v235 = vadd.f32 %v231, 1e-05
  %v236 = vadd.f32 %v232, 1e-05
  %v237 = vrsqrt.pop %v235
  %v238 = vrsqrt.pop %v236
  %v239 = vmul.f32 %v233, %v237
  %v240 = vmul.f32 %v234, %v238
  %242 = vset.pattern.permute.xlu0 0
  %243 = vperm.xlu0 %242, %v239
  %v244 = vpop.permute.xlu0 %243
  %247 = vset.pattern.permute.xlu0 0
  %248 = vperm.xlu0 %247, %v240
  %v249 = vpop.permute.xlu0 %248
  %v251 = vmul.f32 %v209, %v244
  %v252 = vmul.f32 %v210, %v249
  %v253 = vmul.f32 %v211, %v244
  %v254 = vmul.f32 %v212, %v249
  %v255 = vld [vmem:[%s4] sm:$0xff]
  %v256 = vld [vmem:[%s4 + $0x8] sm:$0xff]
  %258 = vset.pattern.permute.xlu0 0
  %259 = vperm.xlu0 %258, %v255
  %v260 = vpop.permute.xlu0 %259
  %263 = vset.pattern.permute.xlu0 0
  %264 = vperm.xlu0 %263, %v256
  %v265 = vpop.permute.xlu0 %264
  %v267 = vadd.f32 %v251, %v260
  %v268 = vadd.f32 %v252, %v265
  %v269 = vadd.f32 %v253, %v260
  %v270 = vadd.f32 %v254, %v265
  %v271 = vmax.f32 %v267, 0.0
  %v272 = vmax.f32 %v268, 0.0
  %v273 = vmax.f32 %v269, 0.0
  %v274 = vmax.f32 %v270, 0.0
  %v275 = vmul.f32 %v271, %v179
  %v276 = vmul.f32 %v272, %v180
  %v277 = vmul.f32 %v273, %v179
  %v278 = vmul.f32 %v274, %v180
  %v279 = vpack.c.bf16 %v276, %v275
  %v280 = vpack.c.bf16 %v278, %v277
  %v283 = vunpack.c.l.b16 %v279
  %v284 = vunpack.c.h.b16 %v279
  %v285 = vunpack.c.l.b16 %v280
  %v286 = vunpack.c.h.b16 %v280
  %v287 = vpack.c.b16 %v283, %v283
  %v288 = vpack.c.b16 %v284, %v284
  %v289 = vpack.c.b16 %v285, %v285
  %v290 = vpack.c.b16 %v286, %v286
  %295 = vst [vmem:[%s8] sm:$0xf] %v287
  %296 = vst [vmem:[%s8 + $0x4] sm:$0xf] %v288
  %297 = vst [vmem:[%s8 + $0x8] sm:$0xf] %v289
  %298 = vst [vmem:[%s8 + $0xc] sm:$0xf] %v290
  // Predicated region
  $region34: #{a_call__.4} parent=0 // pred_check
    _
  $region35: #{a_call__.4} parent=0 // pred_check_branch
    %300 = sbr.rel (0) target = $region37
  $region36: #{a_call__.4} parent=0 // pred_region
    _
  $region37: #{a_call__.4} parent=0 // pred_fallthru
    _
  // Predicated region
  $region38: #{a_call__.4} parent=0 // pred_check
    _
  $region39: #{a_call__.4} parent=0 // pred_check_branch
    %302 = sbr.rel (0) target = $region41
  $region40: #{a_call__.4} parent=0 // pred_region
    _
  $region41: #{a_call__.4} parent=0 // pred_fallthru
    _

// kernel: a_call__.5
$region0: #{a_call__.5}
  #allocation0 [shape = 'u32[]', space=smem, size = 0x4, offset = 0x4, fixed_abs, tag = 'smem constant byte address 0x4 - core index']
  #allocation1 [shape = 'u32[144,128]{1,0:T(1,128)}', space=vmem, size = 0x12000, scoped, tag = 'internal scratch']
  %s0 = inlined_call_operand.vmem [shape: bf16[2,16,128], index: 0, kind: input, shape index: {}]
  %s1 = inlined_call_operand.vmem [shape: bf16[128,256], index: 1, kind: input, shape index: {}]
  %s2 = inlined_call_operand.vmem [shape: bf16[2,16,256], index: 2, kind: output, shape index: {}]
  %s3 = sld [smem:[#allocation0]]
  $region18: #{a_call__.5} parent=0
    _
  %s5 = ssub.s32 1, %s3
  %s6 = scalar_select 0, %s5, %s3
  // Predicated region
  $region2: #{a_call__.5} parent=0 // pred_check
    _
  $region3: #{a_call__.5} parent=0 // pred_check_branch
    %8 = sbr.rel (0) target = $region5
  $region4: #{a_call__.5} parent=0 // pred_region
    _
  $region5: #{a_call__.5} parent=0 // pred_fallthru
    _
  // Predicated region
  $region6: #{a_call__.5} parent=0 // pred_check
    _
  $region7: #{a_call__.5} parent=0 // pred_check_branch
    %10 = sbr.rel (0) target = $region9
  $region8: #{a_call__.5} parent=0 // pred_region
    _
  $region9: #{a_call__.5} parent=0 // pred_fallthru
    _
  %v12 = vld [vmem:[%s0] sm:$0xf]
  %v13 = vld [vmem:[%s0 + $0x4] sm:$0xf]
  %v14 = vld [vmem:[%s0 + $0x8] sm:$0xf]
  %v15 = vld [vmem:[%s0 + $0xc] sm:$0xf]
  %v16 = vld [vmem:[%s1] sm:$0xff]
  %v17 = vld [vmem:[%s1 + $0x8] sm:$0xff]
  %v18 = vld [vmem:[%s1 + $0x10] sm:$0xff]
  %v19 = vld [vmem:[%s1 + $0x18] sm:$0xff]
  %v20 = vld [vmem:[%s1 + $0x20] sm:$0xff]
  %v21 = vld [vmem:[%s1 + $0x28] sm:$0xff]
  %v22 = vld [vmem:[%s1 + $0x30] sm:$0xff]
  %v23 = vld [vmem:[%s1 + $0x38] sm:$0xff]
  %v24 = vld [vmem:[%s1 + $0x40] sm:$0xff]
  %v25 = vld [vmem:[%s1 + $0x48] sm:$0xff]
  %v26 = vld [vmem:[%s1 + $0x50] sm:$0xff]
  %v27 = vld [vmem:[%s1 + $0x58] sm:$0xff]
  %v28 = vld [vmem:[%s1 + $0x60] sm:$0xff]
  %v29 = vld [vmem:[%s1 + $0x68] sm:$0xff]
  %v30 = vld [vmem:[%s1 + $0x70] sm:$0xff]
  %v31 = vld [vmem:[%s1 + $0x78] sm:$0xff]
  %v36 = vunpack.c.l.b16 %v12
  %v37 = vunpack.c.l.b16 %v13
  %v38 = vunpack.c.l.b16 %v14
  %v39 = vunpack.c.l.b16 %v15
  %v40 = vpack.c.b16 %v37, %v36
  %v41 = vpack.c.b16 %v39, %v38
  %v60 = vunpack.c.l.b16 %v16
  %v61 = vunpack.c.h.b16 %v16
  %v62 = vunpack.c.l.b16 %v17
  %v63 = vunpack.c.h.b16 %v17
  %v64 = vunpack.c.l.b16 %v18
  %v65 = vunpack.c.h.b16 %v18
  %v66 = vunpack.c.l.b16 %v19
  %v67 = vunpack.c.h.b16 %v19
  %v68 = vunpack.c.l.b16 %v20
  %v69 = vunpack.c.h.b16 %v20
  %v70 = vunpack.c.l.b16 %v21
  %v71 = vunpack.c.h.b16 %v21
  %v72 = vunpack.c.l.b16 %v22
  %v73 = vunpack.c.h.b16 %v22
  %v74 = vunpack.c.l.b16 %v23
  %v75 = vunpack.c.h.b16 %v23
  %v76 = vunpack.c.l.b16 %v24
  %v77 = vunpack.c.h.b16 %v24
  %v78 = vunpack.c.l.b16 %v25
  %v79 = vunpack.c.h.b16 %v25
  %v80 = vunpack.c.l.b16 %v26
  %v81 = vunpack.c.h.b16 %v26
  %v82 = vunpack.c.l.b16 %v27
  %v83 = vunpack.c.h.b16 %v27
  %v84 = vunpack.c.l.b16 %v28
  %v85 = vunpack.c.h.b16 %v28
  %v86 = vunpack.c.l.b16 %v29
  %v87 = vunpack.c.h.b16 %v29
  %v88 = vunpack.c.l.b16 %v30
  %v89 = vunpack.c.h.b16 %v30
  %v90 = vunpack.c.l.b16 %v31
  %v91 = vunpack.c.h.b16 %v31
  %v92 = vpack.c.b16 %v62, %v60
  %v93 = vpack.c.b16 %v63, %v61
  %v94 = vpack.c.b16 %v66, %v64
  %v95 = vpack.c.b16 %v67, %v65
  %v96 = vpack.c.b16 %v70, %v68
  %v97 = vpack.c.b16 %v71, %v69
  %v98 = vpack.c.b16 %v74, %v72
  %v99 = vpack.c.b16 %v75, %v73
  %v100 = vpack.c.b16 %v78, %v76
  %v101 = vpack.c.b16 %v79, %v77
  %v102 = vpack.c.b16 %v82, %v80
  %v103 = vpack.c.b16 %v83, %v81
  %v104 = vpack.c.b16 %v86, %v84
  %v105 = vpack.c.b16 %v87, %v85
  %v106 = vpack.c.b16 %v90, %v88
  %v107 = vpack.c.b16 %v91, %v89
  %124 = vmatprep.subr.bf16.mxu0 %v93
  %125 = vmatpush1.bf16.msra.mxu0 %v92
  %126 = vmatprep.subr.bf16.mxu0 %v95
  %127 = vmatpush1.bf16.msra.mxu0 %v94
  %128 = vmatprep.subr.bf16.mxu0 %v97
  %129 = vmatpush1.bf16.msra.mxu0 %v96
  %130 = vmatprep.subr.bf16.mxu0 %v99
  %131 = vmatpush1.bf16.msra.mxu0 %v98
  %132 = vmatprep.subr.bf16.mxu0 %v101
  %133 = vmatpush1.bf16.msra.mxu0 %v100
  %134 = vmatprep.subr.bf16.mxu0 %v103
  %135 = vmatpush1.bf16.msra.mxu0 %v102
  %136 = vmatprep.subr.bf16.mxu0 %v105
  %137 = vmatpush1.bf16.msra.mxu0 %v104
  %138 = vmatprep.subr.bf16.mxu0 %v107
  %139 = vmatpush1.bf16.msra.mxu0 %v106
  %140 = vmatprep.subr.bf16.mxu0 0
  %141 = vmatpush1.bf16.msra.mxu0 0
  %142 = vmatprep.subr.bf16.mxu0 0
  %143 = vmatpush1.bf16.msra.mxu0 0
  %144 = vmatprep.subr.bf16.mxu0 0
  %145 = vmatpush1.bf16.msra.mxu0 0
  %146 = vmatprep.subr.bf16.mxu0 0
  %147 = vmatpush1.bf16.msra.mxu0 0
  %148 = vmatprep.subr.bf16.mxu0 0
  %149 = vmatpush1.bf16.msra.mxu0 0
  %150 = vmatprep.subr.bf16.mxu0 0
  %151 = vmatpush1.bf16.msra.mxu0 0
  %152 = vmatprep.subr.bf16.mxu0 0
  %153 = vmatpush1.bf16.msra.mxu0 0
  %154 = vmatprep.subr.bf16.mxu0 0
  %155 = vmatpush1.bf16.msra.mxu0 0
  %156 = vmatprep.mubr.bf16.mxu0 0
  %157 = vmatmul.mubr.bf16.gmra.mrb[0].mxu0 %v40
  %v158 = vpop.f32.mrb[0].mxu0
  %v159 = vadd.f32 0.0, %v158
  %v160 = vpop.f32.mrb[0].mxu0
  %v161 = vadd.f32 0.0, %v160
  %v162 = vpop.f32.mrb[0].mxu0
  %v163 = vadd.f32 0.0, %v162
  %v164 = vpop.f32.mrb[0].mxu0
  %v165 = vadd.f32 0.0, %v164
  %166 = vmatprep.mubr.bf16.mxu0 0
  %167 = vmatmul.mubr.bf16.gmra.mrb[0].mxu0 %v41
  %v168 = vpop.f32.mrb[0].mxu0
  %v169 = vadd.f32 0.0, %v168
  %v170 = vpop.f32.mrb[0].mxu0
  %v171 = vadd.f32 0.0, %v170
  %v172 = vpop.f32.mrb[0].mxu0
  %v173 = vadd.f32 0.0, %v172
  %v174 = vpop.f32.mrb[0].mxu0
  %v175 = vadd.f32 0.0, %v174
  %176 = vdwg.mxu0
  %v177 = vpack.c.bf16 %v163, %v159
  %v178 = vpack.c.bf16 %v165, %v161
  %v179 = vpack.c.bf16 %v173, %v169
  %v180 = vpack.c.bf16 %v175, %v171
  %v185 = vunpack.c.l.b16 %v177
  %v186 = vunpack.c.l.b16 %v178
  %v187 = vunpack.c.h.b16 %v177
  %v188 = vunpack.c.h.b16 %v178
  %v189 = vunpack.c.l.b16 %v179
  %v190 = vunpack.c.l.b16 %v180
  %v191 = vunpack.c.h.b16 %v179
  %v192 = vunpack.c.h.b16 %v180
  %v193 = vpack.c.b16 %v186, %v185
  %v194 = vpack.c.b16 %v188, %v187
  %v195 = vpack.c.b16 %v190, %v189
  %v196 = vpack.c.b16 %v192, %v191
  %201 = vst [vmem:[%s2] sm:$0xff] %v193
  %202 = vst [vmem:[%s2 + $0x8] sm:$0xff] %v194
  %203 = vst [vmem:[%s2 + $0x10] sm:$0xff] %v195
  %204 = vst [vmem:[%s2 + $0x18] sm:$0xff] %v196
  // Predicated region
  $region10: #{a_call__.5} parent=0 // pred_check
    _
  $region11: #{a_call__.5} parent=0 // pred_check_branch
    %206 = sbr.rel (0) target = $region13
  $region12: #{a_call__.5} parent=0 // pred_region
    _
  $region13: #{a_call__.5} parent=0 // pred_fallthru
    _
  // Predicated region
  $region14: #{a_call__.5} parent=0 // pred_check
    _
  $region15: #{a_call__.5} parent=0 // pred_check_branch
    %208 = sbr.rel (0) target = $region17
  $region16: #{a_call__.5} parent=0 // pred_region
    _
  $region17: #{a_call__.5} parent=0 // pred_fallthru
    _

</llo_original>
